<compile_context>
chip_gen: v7x
topology: tpu7x:2x2x1
jax: 0.10.0
libtpu: 0.0.40
codegen_flags: <defaults>
</compile_context>

<pallas_src>
import functools

import jax
import jax.numpy as jnp
from jax import lax
from jax.experimental import pallas as pl
from jax.experimental.pallas import tpu as pltpu

_LANE = 128
_SUBLANE = 8


def _physical_vmem_bytes():
    """Per-generation physical VMEM (v5e/v6e: 128 MiB, v7x: 64 MiB/core); safe fallback."""
    try:
        info = pltpu.get_tpu_info()
        for name in ("vmem_capacity_bytes", "vmem_bytes", "vmem_size_bytes"):
            v = getattr(info, name, None)
            if v:
                return int(v)
    except Exception:
        pass
    return 64 * 1024 * 1024  # conservative (v7x figure)


def _choose_tiling(N, D, T, itemsize, budget_bytes):
    """Pick (block_n, t_tile).

    Hard layout constraints (trailing-two-dims (8,128) rule):
      * input block (block_n, D, t_tile): D is always full; t_tile % 128 == 0 or t_tile == T
      * output block (block_n, D):        block_n % 8 == 0 or block_n == N
    Soft goals: fit the double-buffered working set in `budget_bytes`, keep >= ~8 batch
    steps when N allows (pipelining + v7x 2-TC split), prefer block_n that divides N.
    """
    stats_row = 3 * D * _LANE * 4      # lane-padded f32 online-softmax scratch per row
    out_row = 2 * D * 4                # double-buffered output slab per row

    def row_bytes(tt):                 # double-buffered h + scratch + out, per batch row
        return 2 * D * tt * itemsize + stats_row + out_row

    min_rows = N if N < _SUBLANE else _SUBLANE

    # --- T tile: whole sequence if even the smallest legal batch block fits; otherwise
    #     the largest multiple of 128 that does (the kernel masks any padded tail tile).
    if T <= _LANE or min_rows * row_bytes(T) <= budget_bytes:
        t_tile = T
    else:
        avail_t = (budget_bytes // min_rows - stats_row - out_row) // (2 * D * itemsize)
        t_tile = min(T, max(_LANE, (int(avail_t) // _LANE) * _LANE))

    # --- batch block from the remaining budget.
    afford = max(1, int(budget_bytes // row_bytes(t_tile)))
    if N >= 2 * _SUBLANE:
        # keep >= ~8 batch-axis steps for DMA/compute overlap and the v7x core split
        afford = min(afford, max(_SUBLANE, ((N // 8) // _SUBLANE) * _SUBLANE))
    if afford >= N:
        block_n = N
    elif afford >= _SUBLANE:
        block_n = (afford // _SUBLANE) * _SUBLANE
        for cand in range(block_n, _SUBLANE - 1, -_SUBLANE):  # prefer a divisor of N
            if N % cand == 0:
                block_n = cand
                break
    else:
        block_n = N if N < _SUBLANE else _SUBLANE  # layout rule wins over the soft budget
    return int(min(block_n, N)), int(min(t_tile, T))


def _sap_kernel(h_ref, w_ref, b_ref, o_ref, m_acc, d_acc, n_acc, *,
                t_total, t_tile, block_n):
    # h_ref : (block_n, D, t_tile)  channel-major (free NCHW reshape), T on lanes
    # w_ref : (D, D)                torch Linear weight, consumed untransposed
    # b_ref : (D, 1)                bias column
    # o_ref : (block_n, D)          pooled output slab (lane-dense store)
    # m/d/n_acc : (block_n, D, 1) f32 online-softmax running max / denom / weighted sum
    k = pl.program_id(1)
    needs_mask = (t_total % t_tile) != 0  # static: only the padded tail tile needs it

    @pl.when(k == 0)
    def _init():
        m_acc[...] = jnp.full(m_acc.shape, -jnp.inf, m_acc.dtype)
        d_acc[...] = jnp.zeros(d_acc.shape, d_acc.dtype)
        n_acc[...] = jnp.zeros(n_acc.shape, n_acc.dtype)

    # Explicit f32 (be explicit about matmul dtype; bf16 fast path is a TODO above).
    w = w_ref[...].astype(jnp.float32)
    b = b_ref[...].astype(jnp.float32)                      # (D, 1)

    if needs_mask:
        col = lax.broadcasted_iota(jnp.int32, (1, t_tile), 1)
        valid = (k * t_tile + col) < t_total                # (1, t_tile)

    @pl.loop(0, block_n)
    def _row(r):
        h = h_ref[r].astype(jnp.float32)                    # (D, t_tile)
        if needs_mask:
            h = jnp.where(valid, h, 0.0)                    # zero padded cols (kills NaN garbage)
        # Pre-softmax scores: s[k, t] = sum_d W[k, d] * h[d, t] + b[k]   (one MXU matmul)
        s = jnp.dot(w, h, preferred_element_type=jnp.float32) + b        # (D, t_tile)
        if needs_mask:
            s = jnp.where(valid, s, -jnp.inf)               # padded cols contribute exp()==0

        # Online softmax over T (lane axis), fused with the weighted pooling.
        m_prev = m_acc[r]                                   # (D, 1)
        m_new = jnp.maximum(m_prev, jnp.max(s, axis=-1, keepdims=True))
        alpha = jnp.exp(m_prev - m_new)                     # rescale of previous tiles
        p = jnp.exp(s - m_new)                              # (D, t_tile), EUP
        d_acc[r] = alpha * d_acc[r] + jnp.sum(p, axis=-1, keepdims=True)
        n_acc[r] = alpha * n_acc[r] + jnp.sum(p * h, axis=-1, keepdims=True)
        m_acc[r] = m_new

    @pl.when(k == pl.num_programs(1) - 1)
    def _finalize():
        # (D, 1)-sized reciprocal instead of a (D, T) divide; normalized scores are
        # never materialized.
        pooled = n_acc[...] * pl.reciprocal(d_acc[...], approx=False)    # (block_n, D, 1)
        o_ref[...] = pooled[:, :, 0].astype(o_ref.dtype)                 # lane-dense (block_n, D)


def self_attentive_pool(x, weight, bias, *, block_n=None, t_tile=None,
                        vmem_limit_bytes=None):
    """x: [N, D, n_mels, n_frames] (NCHW). weight: [D, D], bias: [D]. Returns [N, D] f32."""
    N, D, n_mels, n_frames = x.shape
    T = n_mels * n_frames
    # Free reshape: NCHW stores (n_mels, n_frames) contiguously per channel, so no extra
    # HBM read+write pass (unlike an NCHW -> NTD transpose).
    h = x.reshape(N, D, T)
    itemsize = jnp.dtype(x.dtype).itemsize

    if vmem_limit_bytes is None:
        phys = _physical_vmem_bytes()
        vmem_limit_bytes = int(min(phys // 2, 100 * 1024 * 1024))
    # Working-set budget for the pipelined blocks; leave headroom for weight/bias blocks.
    fixed = 2 * D * D * jnp.dtype(weight.dtype).itemsize + 2 * D * _LANE * 4
    budget = max(1 << 20, int(vmem_limit_bytes * 0.7) - fixed)

    auto_bn, auto_tt = _choose_tiling(N, D, T, itemsize, budget)
    block_n = int(min(block_n if block_n is not None else auto_bn, N))
    t_tile = int(min(t_tile if t_tile is not None else auto_tt, T))
    assert block_n == N or block_n % _SUBLANE == 0, "block_n must divide 8 or equal N"
    assert t_tile == T or t_tile % _LANE == 0, "t_tile must be a multiple of 128 or equal T"

    grid = (pl.cdiv(N, block_n), pl.cdiv(T, t_tile))
    kernel = functools.partial(_sap_kernel, t_total=T, t_tile=t_tile, block_n=block_n)

    out = pl.pallas_call(
        kernel,
        out_shape=jax.ShapeDtypeStruct((N, D), jnp.float32),
        grid=grid,
        in_specs=[
            pl.BlockSpec((block_n, D, t_tile), lambda i, k: (i, 0, k)),  # batch x T tiles
            pl.BlockSpec((D, D), lambda i, k: (0, 0)),                   # shared weight
            pl.BlockSpec((D, 1), lambda i, k: (0, 0)),                   # shared bias col
        ],
        out_specs=pl.BlockSpec((block_n, D), lambda i, k: (i, 0)),       # lane-dense slab
        scratch_shapes=[
            pltpu.VMEM((block_n, D, 1), jnp.float32),  # running max
            pltpu.VMEM((block_n, D, 1), jnp.float32),  # running sum(exp)
            pltpu.VMEM((block_n, D, 1), jnp.float32),  # running sum(exp * h)
        ],
        compiler_params=pltpu.CompilerParams(
            dimension_semantics=("parallel", "arbitrary"),
            vmem_limit_bytes=int(vmem_limit_bytes),
        ),
    )(h, weight, bias.reshape(D, 1))
    return out


def reference(x, weight, bias):
    n, d, hh, ww = x.shape
    H = jnp.transpose(x, (0, 2, 3, 1)).reshape(n, hh * ww, d).astype(jnp.float32)
    s = jnp.einsum("ntd,kd->ntk", H, weight.astype(jnp.float32)) + bias.astype(jnp.float32)
    scores = jax.nn.softmax(s, axis=1)
    return jnp.sum(scores * H, axis=1)


def _run_case(key, N, D, n_mels, n_frames, **kw):
    kx, kwt, kb = jax.random.split(key, 3)
    x = jax.random.normal(kx, (N, D, n_mels, n_frames), dtype=jnp.float32)
    weight = jax.random.normal(kwt, (D, D), dtype=jnp.float32) * (1.0 / jnp.sqrt(D))
    bias = jax.random.normal(kb, (D,), dtype=jnp.float32) * 0.1

    out = jax.block_until_ready(self_attentive_pool(x, weight, bias, **kw))
    ref = reference(x, weight, bias)
    assert out.shape == (N, D)
    err = float(jnp.max(jnp.abs(out - ref)))
    assert jnp.allclose(out, ref, atol=2e-4, rtol=2e-4), f"mismatch vs reference (max abs err {err:.3e})"


if __name__ == "__main__":
    key = jax.random.PRNGKey(0)
    k1, k2 = jax.random.split(key)
    # Case 1: small module-consistent shapes (batch=2, hidden=32, 4x4 spatial -> T=16);
    # whole-T block, single step on each grid axis.
    _run_case(k1, N=2, D=32, n_mels=4, n_frames=4)
    # Case 2: exercises the production path: batch grid (block_n=8 < N), T grid with the
    # online-softmax accumulators and a masked padded tail tile (T=200, t_tile=128).
    _run_case(k2, N=16, D=32, n_mels=10, n_frames=20, block_n=8, t_tile=128)
    print("KERNEL_OK")
</pallas_src>

<mosaic_0001>
module attributes {stable_mosaic.version = 11 : i64} {
  func.func @_sap_kernel(%arg0: i32, %arg1: i32, %arg2: memref<2x32x16xf32, #tpu.memory_space<vmem>>, %arg3: memref<32x32xf32, #tpu.memory_space<vmem>>, %arg4: memref<32x1xf32, #tpu.memory_space<vmem>>, %arg5: memref<2x32xf32, #tpu.memory_space<vmem>>, %arg6: memref<2x32x1xf32, #tpu.memory_space<vmem>>, %arg7: memref<2x32x1xf32, #tpu.memory_space<vmem>>, %arg8: memref<2x32x1xf32, #tpu.memory_space<vmem>>) attributes {dimension_semantics = [#tpu.dimension_semantics<parallel>, #tpu.dimension_semantics<arbitrary>], iteration_bounds = array<i64: 1, 1>, scalar_prefetch = 0 : i64, scratch_operands = 3 : i64, tpu.core_type = #tpu.core_type<tc>, window_params = [{transform_indices = @transform_0, window_bounds = array<i64: 2, 32, 16>}, {pipeline_mode = #tpu.pipeline_mode<synchronous>, transform_indices = @transform_1, window_bounds = array<i64: 32, 32>}, {pipeline_mode = #tpu.pipeline_mode<synchronous>, transform_indices = @transform_2, window_bounds = array<i64: 32, 1>}, {transform_indices = @transform_3, window_bounds = array<i64: 2, 32>}]} {
    %c0_i32 = arith.constant 0 : i32
    %0 = arith.cmpi eq, %arg1, %c0_i32 : i32
    %1 = arith.extui %0 : i1 to i32
    %c0_i32_0 = arith.constant 0 : i32
    %2 = arith.cmpi ne, %1, %c0_i32_0 : i32
    scf.if %2 {
      %cst = arith.constant 0xFF800000 : f32
      %9 = vector.broadcast %cst : f32 to vector<2x32x1xf32>
      %c0_8 = arith.constant 0 : index
      %c0_9 = arith.constant 0 : index
      %c0_10 = arith.constant 0 : index
      %10 = vector.load %arg6[%c0_8, %c0_9, %c0_10] : memref<2x32x1xf32, #tpu.memory_space<vmem>>, vector<2x32x1xf32>
      tpu.vector_store %arg6[%c0_8, %c0_9, %c0_10], %9 {strides = array<i32>} : memref<2x32x1xf32, #tpu.memory_space<vmem>>, vector<2x32x1xf32>,
      %cst_11 = arith.constant 0.000000e+00 : f32
      %11 = vector.broadcast %cst_11 : f32 to vector<2x32x1xf32>
      %c0_12 = arith.constant 0 : index
      %c0_13 = arith.constant 0 : index
      %c0_14 = arith.constant 0 : index
      %12 = vector.load %arg7[%c0_12, %c0_13, %c0_14] : memref<2x32x1xf32, #tpu.memory_space<vmem>>, vector<2x32x1xf32>
      tpu.vector_store %arg7[%c0_12, %c0_13, %c0_14], %11 {strides = array<i32>} : memref<2x32x1xf32, #tpu.memory_space<vmem>>, vector<2x32x1xf32>,
      %cst_15 = arith.constant 0.000000e+00 : f32
      %13 = vector.broadcast %cst_15 : f32 to vector<2x32x1xf32>
      %c0_16 = arith.constant 0 : index
      %c0_17 = arith.constant 0 : index
      %c0_18 = arith.constant 0 : index
      %14 = vector.load %arg8[%c0_16, %c0_17, %c0_18] : memref<2x32x1xf32, #tpu.memory_space<vmem>>, vector<2x32x1xf32>
      tpu.vector_store %arg8[%c0_16, %c0_17, %c0_18], %13 {strides = array<i32>} : memref<2x32x1xf32, #tpu.memory_space<vmem>>, vector<2x32x1xf32>,
    } else {
    }
    %c0 = arith.constant 0 : index
    %c0_1 = arith.constant 0 : index
    %3 = vector.load %arg3[%c0, %c0_1] : memref<32x32xf32, #tpu.memory_space<vmem>>, vector<32x32xf32>
    %c0_2 = arith.constant 0 : index
    %c0_3 = arith.constant 0 : index
    %4 = vector.load %arg4[%c0_2, %c0_3] : memref<32x1xf32, #tpu.memory_space<vmem>>, vector<32x1xf32>
    %c0_i32_4 = arith.constant 0 : i32
    %c2_i32 = arith.constant 2 : i32
    %5 = arith.addi %c0_i32_4, %c2_i32 : i32
    %c1_i32 = arith.constant 1 : i32
    scf.for %arg9 = %c0_i32_4 to %5 step %c1_i32  : i32 {
      %c1_i32_8 = arith.constant 1 : i32
      %9 = arith.muli %arg9, %c1_i32_8 : i32
      %c0_i32_9 = arith.constant 0 : i32
      %10 = arith.addi %c0_i32_9, %9 : i32
      %11 = arith.index_cast %10 : i32 to index
      %c0_10 = arith.constant 0 : index
      %c0_11 = arith.constant 0 : index
      %12 = vector.load %arg2[%11, %c0_10, %c0_11] : memref<2x32x16xf32, #tpu.memory_space<vmem>>, vector<1x32x16xf32>
      %13 = vector.shape_cast %12 : vector<1x32x16xf32> to vector<32x16xf32>
      %cst = arith.constant dense<0.000000e+00> : vector<32x16xf32>
      %14 = tpu.matmul %3, %13, %cst {dimension_numbers = #tpu.dot_dimension_numbers<[1], [0], [0], [1], [0, 0, 1, 1], [], []>} : vector<32x32xf32>, vector<32x16xf32>, vector<32x16xf32> -> vector<32x16xf32>
      %15 = vector.broadcast %4 : vector<32x1xf32> to vector<32x16xf32>
      %16 = arith.addf %14, %15 : vector<32x16xf32>
      %17 = arith.index_cast %10 : i32 to index
      %c0_12 = arith.constant 0 : index
      %c0_13 = arith.constant 0 : index
      %18 = vector.load %arg6[%17, %c0_12, %c0_13] : memref<2x32x1xf32, #tpu.memory_space<vmem>>, vector<1x32x1xf32>
      %19 = vector.shape_cast %18 : vector<1x32x1xf32> to vector<32x1xf32>
      %cst_14 = arith.constant dense<0xFF800000> : vector<32xf32>
      %20 = vector.multi_reduction <maximumf>, %16, %cst_14 [1] : vector<32x16xf32> to vector<32xf32>
      %21 = vector.shape_cast %20 : vector<32xf32> to vector<32x1xf32>
      %22 = arith.maximumf %19, %21 : vector<32x1xf32>
      %23 = arith.subf %19, %22 : vector<32x1xf32>
      %24 = math.exp %23 : vector<32x1xf32>
      %25 = vector.broadcast %22 : vector<32x1xf32> to vector<32x16xf32>
      %26 = arith.subf %16, %25 : vector<32x16xf32>
      %27 = math.exp %26 : vector<32x16xf32>
      %28 = arith.index_cast %10 : i32 to index
      %c0_15 = arith.constant 0 : index
      %c0_16 = arith.constant 0 : index
      %29 = vector.load %arg7[%28, %c0_15, %c0_16] : memref<2x32x1xf32, #tpu.memory_space<vmem>>, vector<1x32x1xf32>
      %30 = vector.shape_cast %29 : vector<1x32x1xf32> to vector<32x1xf32>
      %31 = arith.mulf %24, %30 : vector<32x1xf32>
      %cst_17 = arith.constant dense<0.000000e+00> : vector<32xf32>
      %32 = vector.multi_reduction <add>, %27, %cst_17 [1] : vector<32x16xf32> to vector<32xf32>
      %33 = vector.shape_cast %32 : vector<32xf32> to vector<32x1xf32>
      %34 = arith.addf %31, %33 : vector<32x1xf32>
      %35 = arith.index_cast %10 : i32 to index
      %c0_18 = arith.constant 0 : index
      %c0_19 = arith.constant 0 : index
      %36 = vector.load %arg7[%35, %c0_18, %c0_19] : memref<2x32x1xf32, #tpu.memory_space<vmem>>, vector<1x32x1xf32>
      %37 = vector.shape_cast %36 : vector<1x32x1xf32> to vector<32x1xf32>
      %38 = vector.shape_cast %34 : vector<32x1xf32> to vector<1x32x1xf32>
      tpu.vector_store %arg7[%35, %c0_18, %c0_19], %38 {strides = array<i32>} : memref<2x32x1xf32, #tpu.memory_space<vmem>>, vector<1x32x1xf32>,
      %39 = arith.index_cast %10 : i32 to index
      %c0_20 = arith.constant 0 : index
      %c0_21 = arith.constant 0 : index
      %40 = vector.load %arg8[%39, %c0_20, %c0_21] : memref<2x32x1xf32, #tpu.memory_space<vmem>>, vector<1x32x1xf32>
      %41 = vector.shape_cast %40 : vector<1x32x1xf32> to vector<32x1xf32>
      %42 = arith.mulf %24, %41 : vector<32x1xf32>
      %43 = arith.mulf %27, %13 : vector<32x16xf32>
      %cst_22 = arith.constant dense<0.000000e+00> : vector<32xf32>
      %44 = vector.multi_reduction <add>, %43, %cst_22 [1] : vector<32x16xf32> to vector<32xf32>
      %45 = vector.shape_cast %44 : vector<32xf32> to vector<32x1xf32>
      %46 = arith.addf %42, %45 : vector<32x1xf32>
      %47 = arith.index_cast %10 : i32 to index
      %c0_23 = arith.constant 0 : index
      %c0_24 = arith.constant 0 : index
      %48 = vector.load %arg8[%47, %c0_23, %c0_24] : memref<2x32x1xf32, #tpu.memory_space<vmem>>, vector<1x32x1xf32>
      %49 = vector.shape_cast %48 : vector<1x32x1xf32> to vector<32x1xf32>
      %50 = vector.shape_cast %46 : vector<32x1xf32> to vector<1x32x1xf32>
      tpu.vector_store %arg8[%47, %c0_23, %c0_24], %50 {strides = array<i32>} : memref<2x32x1xf32, #tpu.memory_space<vmem>>, vector<1x32x1xf32>,
      %51 = arith.index_cast %10 : i32 to index
      %c0_25 = arith.constant 0 : index
      %c0_26 = arith.constant 0 : index
      %52 = vector.load %arg6[%51, %c0_25, %c0_26] : memref<2x32x1xf32, #tpu.memory_space<vmem>>, vector<1x32x1xf32>
      %53 = vector.shape_cast %52 : vector<1x32x1xf32> to vector<32x1xf32>
      %54 = vector.shape_cast %22 : vector<32x1xf32> to vector<1x32x1xf32>
      tpu.vector_store %arg6[%51, %c0_25, %c0_26], %54 {strides = array<i32>} : memref<2x32x1xf32, #tpu.memory_space<vmem>>, vector<1x32x1xf32>,
    }
    %c2_i32_5 = arith.constant 2 : i32
    %c0_i32_6 = arith.constant 0 : i32
    %6 = arith.cmpi eq, %arg1, %c0_i32_6 : i32
    %7 = arith.extui %6 : i1 to i32
    %c0_i32_7 = arith.constant 0 : i32
    %8 = arith.cmpi ne, %7, %c0_i32_7 : i32
    scf.if %8 {
      %c0_8 = arith.constant 0 : index
      %c0_9 = arith.constant 0 : index
      %c0_10 = arith.constant 0 : index
      %9 = vector.load %arg8[%c0_8, %c0_9, %c0_10] : memref<2x32x1xf32, #tpu.memory_space<vmem>>, vector<2x32x1xf32>
      %c0_11 = arith.constant 0 : index
      %c0_12 = arith.constant 0 : index
      %c0_13 = arith.constant 0 : index
      %10 = vector.load %arg7[%c0_11, %c0_12, %c0_13] : memref<2x32x1xf32, #tpu.memory_space<vmem>>, vector<2x32x1xf32>
      %11 = tpu.reciprocal %10 : vector<2x32x1xf32> -> vector<2x32x1xf32>
      %12 = arith.mulf %9, %11 : vector<2x32x1xf32>
      %13 = vector.shape_cast %12 : vector<2x32x1xf32> to vector<2x32xf32>
      %c0_14 = arith.constant 0 : index
      %c0_15 = arith.constant 0 : index
      %14 = vector.load %arg5[%c0_14, %c0_15] : memref<2x32xf32, #tpu.memory_space<vmem>>, vector<2x32xf32>
      tpu.vector_store %arg5[%c0_14, %c0_15], %13 {strides = array<i32>} : memref<2x32xf32, #tpu.memory_space<vmem>>, vector<2x32xf32>,
    } else {
    }
    return
  }
  func.func @transform_0(%arg0: i32, %arg1: i32) -> (i32, i32, i32) {
    %c0_i32 = arith.constant 0 : i32
    %c0_i32_0 = arith.constant 0 : i32
    return %arg0, %c0_i32, %arg1 : i32, i32, i32
  }
  func.func @transform_1(%arg0: i32, %arg1: i32) -> (i32, i32) {
    %c0_i32 = arith.constant 0 : i32
    %c0_i32_0 = arith.constant 0 : i32
    %c0_i32_1 = arith.constant 0 : i32
    return %c0_i32, %c0_i32_0 : i32, i32
  }
  func.func @transform_2(%arg0: i32, %arg1: i32) -> (i32, i32) {
    %c0_i32 = arith.constant 0 : i32
    %c0_i32_0 = arith.constant 0 : i32
    %c0_i32_1 = arith.constant 0 : i32
    return %c0_i32, %c0_i32_0 : i32, i32
  }
  func.func @transform_3(%arg0: i32, %arg1: i32) -> (i32, i32) {
    %c0_i32 = arith.constant 0 : i32
    %c0_i32_0 = arith.constant 0 : i32
    return %arg0, %c0_i32 : i32, i32
  }
}

</mosaic_0001>

<llo_original>
// kernel: tpu_custom_call.1
$region0: #{tpu_custom_call.1}
  #allocation0 [shape = 'u32[]', space=smem, size = 0x4, offset = 0x4, fixed_abs, tag = 'smem constant byte address 0x4 - core index']
  #allocation1 [shape = 'u32[144,128]{1,0:T(1,128)}', space=vmem, size = 0x12000, scoped, tag = 'internal scratch']
  #allocation2 [shape = 'f32[2,32,1]{2,1,0:T(8,128)}', space=vmem, size = 0x8000, scoped, tag = 'scratch operand']
  #allocation3 [shape = 'f32[2,32,1]{2,1,0:T(8,128)}', space=vmem, size = 0x8000, scoped, tag = 'scratch operand']
  #allocation4 [shape = 'f32[2,32,1]{2,1,0:T(8,128)}', space=vmem, size = 0x8000, scoped, tag = 'scratch operand']
  %s0 = inlined_call_operand.vmem [shape: f32[2,32,16], index: 0, kind: input, shape index: {}]
  %s1 = inlined_call_operand.vmem [shape: f32[32,32], index: 1, kind: input, shape index: {}]
  %s2 = inlined_call_operand.vmem [shape: f32[32,1], index: 2, kind: input, shape index: {}]
  %s3 = inlined_call_operand.hbm [shape: f32[2,32], index: 3, kind: output, shape index: {}]
  %s4 = sld [smem:[#allocation0]]
  $region37: #{tpu_custom_call.1} parent=0
    _
  %s6 = ssub.s32 1, %s4
  %s7 = scalar_select 0, %s6, %s4
  $region1: #{tpu_custom_call.1} parent=0
    #allocation5 [shape = 'u8[1024]{0}', space=vmem, size = 0x400, scoped, tag = 'output window, operand 0, single buffered']
    #allocation6 [shape = 's32[1]{0}', space=sflag, size = 0x4, scoped, tag = 'scoped memory for tpu_custom_call.1']
    %8 = vsyncpa [#allocation6], 0
    // Predicated region
    $region2: #{tpu_custom_call.1} parent=1 // pred_check
      _
    $region3: #{tpu_custom_call.1} parent=1 // pred_check_branch
      %10 = sbr.rel (0) target = $region5
    $region4: #{tpu_custom_call.1} parent=1 // pred_region
      _
    $region5: #{tpu_custom_call.1} parent=1 // pred_fallthru
      _
    // Predicated region
    $region6: #{tpu_custom_call.1} parent=1 // pred_check
      _
    $region7: #{tpu_custom_call.1} parent=1 // pred_check_branch
      %12 = sbr.rel (0) target = $region9
    $region8: #{tpu_custom_call.1} parent=1 // pred_region
      _
    $region9: #{tpu_custom_call.1} parent=1 // pred_fallthru
      _
    // Predicated region
    $region10: #{tpu_custom_call.1} parent=1 // pred_check
      _
    $region11: #{tpu_custom_call.1} parent=1 // pred_check_branch
      %14 = sbr.rel (0) target = $region13
    $region12: #{tpu_custom_call.1} parent=1 // pred_region
      _
    $region13: #{tpu_custom_call.1} parent=1 // pred_fallthru
      _
    %p15 = scmp.eq.s32.totalorder 0, 0
    // Predicated region
    $region14: #{tpu_custom_call.1} parent=1 // pred_check
      %p16 = pneg %p15
    $region15: #{tpu_custom_call.1} parent=1 // pred_check_branch
      %18 = sbr.rel (%p16) target = $region17
    $region16: #{tpu_custom_call.1} parent=1 // pred_region
      %vm19 = vcmask 7168
      %20 = vst.msk [vmem:[#allocation2] sm:$0xff] %vm19, -inf
      %21 = vst.msk [vmem:[#allocation2 + $0x8] sm:$0xff] %vm19, -inf
      %22 = vst.msk [vmem:[#allocation2 + $0x10] sm:$0xff] %vm19, -inf
      %23 = vst.msk [vmem:[#allocation2 + $0x18] sm:$0xff] %vm19, -inf
      %24 = vst.msk [vmem:[#allocation2 + $0x20] sm:$0xff] %vm19, -inf
      %25 = vst.msk [vmem:[#allocation2 + $0x28] sm:$0xff] %vm19, -inf
      %26 = vst.msk [vmem:[#allocation2 + $0x30] sm:$0xff] %vm19, -inf
      %27 = vst.msk [vmem:[#allocation2 + $0x38] sm:$0xff] %vm19, -inf
      %28 = vst.msk [vmem:[#allocation3] sm:$0xff] %vm19, 0.0
      %29 = vst.msk [vmem:[#allocation3 + $0x8] sm:$0xff] %vm19, 0.0
      %30 = vst.msk [vmem:[#allocation3 + $0x10] sm:$0xff] %vm19, 0.0
      %31 = vst.msk [vmem:[#allocation3 + $0x18] sm:$0xff] %vm19, 0.0
      %32 = vst.msk [vmem:[#allocation3 + $0x20] sm:$0xff] %vm19, 0.0
      %33 = vst.msk [vmem:[#allocation3 + $0x28] sm:$0xff] %vm19, 0.0
      %34 = vst.msk [vmem:[#allocation3 + $0x30] sm:$0xff] %vm19, 0.0
      %35 = vst.msk [vmem:[#allocation3 + $0x38] sm:$0xff] %vm19, 0.0
      %36 = vst.msk [vmem:[#allocation4] sm:$0xff] %vm19, 0.0
      %37 = vst.msk [vmem:[#allocation4 + $0x8] sm:$0xff] %vm19, 0.0
      %38 = vst.msk [vmem:[#allocation4 + $0x10] sm:$0xff] %vm19, 0.0
      %39 = vst.msk [vmem:[#allocation4 + $0x18] sm:$0xff] %vm19, 0.0
      %40 = vst.msk [vmem:[#allocation4 + $0x20] sm:$0xff] %vm19, 0.0
      %41 = vst.msk [vmem:[#allocation4 + $0x28] sm:$0xff] %vm19, 0.0
      %42 = vst.msk [vmem:[#allocation4 + $0x30] sm:$0xff] %vm19, 0.0
      %43 = vst.msk [vmem:[#allocation4 + $0x38] sm:$0xff] %vm19, 0.0
    $region17: #{tpu_custom_call.1} parent=1 // pred_fallthru
      _
    %v44 = vld [vmem:[%s1] sm:$0xff]
    %v45 = vld [vmem:[%s1 + $0x8] sm:$0xff]
    %v46 = vld [vmem:[%s1 + $0x10] sm:$0xff]
    %v47 = vld [vmem:[%s1 + $0x18] sm:$0xff]
    %v48 = vld [vmem:[%s2] sm:$0xff]
    %v49 = vld [vmem:[%s2 + $0x8] sm:$0xff]
    %v50 = vld [vmem:[%s2 + $0x10] sm:$0xff]
    %v51 = vld [vmem:[%s2 + $0x18] sm:$0xff]
    loop: start=0, step=1, limit=2
    $region18: #{tpu_custom_call.1} parent=1 // loop_pre_header
      _
    $region19: #{tpu_custom_call.1} parent=1 // loop_header
      %s53 = sphi 0, %s57
      %p54 = scmp.ge.s32.totalorder %s53, 2
    $region20: #{tpu_custom_call.1} parent=1 // loop_header_branch
      %56 = sbr.rel (%p54) target = $region24
    $region21: #{tpu_custom_call.1} parent=1 // loop_body
      %s58 = smul.u32 %s53, 32
      %s59 = scalar_lea.vmem %s0, %s58
      %v60 = vld [vmem:[%s59] sm:$0xff]
      %v61 = vld [vmem:[%s59 + $0x8] sm:$0xff]
      %v62 = vld [vmem:[%s59 + $0x10] sm:$0xff]
      %v63 = vld [vmem:[%s59 + $0x18] sm:$0xff]
      %65 = vset.pattern.permute.xlu0 0
      %66 = vperm.xlu0 %65, %v48
      %v67 = vpop.permute.xlu0 %66
      %70 = vset.pattern.permute.xlu0 0
      %71 = vperm.xlu0 %70, %v49
      %v72 = vpop.permute.xlu0 %71
      %75 = vset.pattern.permute.xlu0 0
      %76 = vperm.xlu0 %75, %v50
      %v77 = vpop.permute.xlu0 %76
      %80 = vset.pattern.permute.xlu0 0
      %81 = vperm.xlu0 %80, %v51
      %v82 = vpop.permute.xlu0 %81
      %vm84 = vcmask 261120
      %v86 = vsel %vm84, %v44, 0
      %v89 = vsel %vm84, %v45, 0
      %v92 = vsel %vm84, %v46, 0
      %v95 = vsel %vm84, %v47, 0
      %97 = vmatprep.subr.mxu0 0.0
      %98 = vmatpush1.msra.mxu0 %v60
      %99 = vmatprep.subr.mxu0 0.0
      %100 = vmatpush1.msra.mxu0 %v61
      %101 = vmatprep.subr.mxu0 0.0
      %102 = vmatpush1.msra.mxu0 %v62
      %103 = vmatprep.subr.mxu0 0.0
      %104 = vmatpush1.msra.mxu0 %v63
      %105 = vmatprep.subr.mxu0 0.0
      %106 = vmatpush1.msra.mxu0 0.0
      %107 = vmatprep.subr.mxu0 0.0
      %108 = vmatpush1.msra.mxu0 0.0
      %109 = vmatprep.subr.mxu0 0.0
      %110 = vmatpush1.msra.mxu0 0.0
      %111 = vmatprep.subr.mxu0 0.0
      %112 = vmatpush1.msra.mxu0 0.0
      %113 = vmatprep.subr.mxu0 0.0
      %114 = vmatpush1.msra.mxu0 0.0
      %115 = vmatprep.subr.mxu0 0.0
      %116 = vmatpush1.msra.mxu0 0.0
      %117 = vmatprep.subr.mxu0 0.0
      %118 = vmatpush1.msra.mxu0 0.0
      %119 = vmatprep.subr.mxu0 0.0
      %120 = vmatpush1.msra.mxu0 0.0
      %121 = vmatprep.subr.mxu0 0.0
      %122 = vmatpush1.msra.mxu0 0.0
      %123 = vmatprep.subr.mxu0 0.0
      %124 = vmatpush1.msra.mxu0 0.0
      %125 = vmatprep.subr.mxu0 0.0
      %126 = vmatpush1.msra.mxu0 0.0
      %127 = vmatprep.subr.mxu0 0.0
      %128 = vmatpush1.msra.mxu0 0.0
      %129 = vmatprep.subr.mxu0 0.0
      %130 = vmatpush1.msra.mxu0 0.0
      %131 = vmatprep.subr.mxu0 0.0
      %132 = vmatpush1.msra.mxu0 0.0
      %133 = vmatprep.subr.mxu0 0.0
      %134 = vmatpush1.msra.mxu0 0.0
      %135 = vmatprep.subr.mxu0 0.0
      %136 = vmatpush1.msra.mxu0 0.0
      %137 = vmatprep.subr.mxu0 0.0
      %138 = vmatpush1.msra.mxu0 0.0
      %139 = vmatprep.subr.mxu0 0.0
      %140 = vmatpush1.msra.mxu0 0.0
      %141 = vmatprep.subr.mxu0 0.0
      %142 = vmatpush1.msra.mxu0 0.0
      %143 = vmatprep.subr.mxu0 0.0
      %144 = vmatpush1.msra.mxu0 0.0
      %145 = vmatprep.subr.mxu0 0.0
      %146 = vmatpush1.msra.mxu0 0.0
      %147 = vmatprep.subr.mxu0 0.0
      %148 = vmatpush1.msra.mxu0 0.0
      %149 = vmatprep.subr.mxu0 0.0
      %150 = vmatpush1.msra.mxu0 0.0
      %151 = vmatprep.subr.mxu0 0.0
      %152 = vmatpush1.msra.mxu0 0.0
      %153 = vmatprep.subr.mxu0 0.0
      %154 = vmatpush1.msra.mxu0 0.0
      %155 = vmatprep.subr.mxu0 0.0
      %156 = vmatpush1.msra.mxu0 0.0
      %157 = vmatprep.subr.mxu0 0.0
      %158 = vmatpush1.msra.mxu0 0.0
      %159 = vmatprep.subr.mxu0 0.0
      %160 = vmatpush1.msra.mxu0 0.0
      %161 = vmatprep.mubr.f32.mxu0 0.0
      %162 = vmatmul.mubr.f32.gmra.mrb[0].mxu0 %v86
      %v163 = vpop.f32.mrb[0].mxu0
      %v164 = vadd.f32 %v67, %v163
      %v165 = vpop.f32.mrb[0].mxu0
      %166 = vmatprep.mubr.f32.mxu0 0.0
      %167 = vmatmul.mubr.f32.gmra.mrb[0].mxu0 %v89
      %v168 = vpop.f32.mrb[0].mxu0
      %v169 = vadd.f32 %v72, %v168
      %v170 = vpop.f32.mrb[0].mxu0
      %171 = vmatprep.mubr.f32.mxu0 0.0
      %172 = vmatmul.mubr.f32.gmra.mrb[0].mxu0 %v92
      %v173 = vpop.f32.mrb[0].mxu0
      %v174 = vadd.f32 %v77, %v173
      %v175 = vpop.f32.mrb[0].mxu0
      %176 = vmatprep.mubr.f32.mxu0 0.0
      %177 = vmatmul.mubr.f32.gmra.mrb[0].mxu0 %v95
      %v178 = vpop.f32.mrb[0].mxu0
      %v179 = vadd.f32 %v82, %v178
      %v180 = vpop.f32.mrb[0].mxu0
      %181 = vdwg.mxu0
      %s182 = scalar_lea.vmem [#allocation2], %s58
      %v183 = vld [vmem:[%s182] sm:$0xff]
      %v184 = vld [vmem:[%s182 + $0x8] sm:$0xff]
      %v185 = vld [vmem:[%s182 + $0x10] sm:$0xff]
      %v186 = vld [vmem:[%s182 + $0x18] sm:$0xff]
      %vm187 = vcmask 130048
      %v188 = vsel %vm187, %v164, -inf
      %189 = vmax.xlane.f32.xlu0 %v188
      %v190 = vpop.xlane.xlu0 %189
      %v191 = vsel %vm187, %v169, -inf
      %192 = vmax.xlane.f32.xlu0 %v191
      %v193 = vpop.xlane.xlu0 %192
      %v194 = vsel %vm187, %v174, -inf
      %195 = vmax.xlane.f32.xlu0 %v194
      %v196 = vpop.xlane.xlu0 %195
      %v197 = vsel %vm187, %v179, -inf
      %198 = vmax.xlane.f32.xlu0 %v197
      %v199 = vpop.xlane.xlu0 %198
      %v200 = vmax.f32 %v183, %v190
      %v201 = vmax.f32 %v184, %v193
      %v202 = vmax.f32 %v185, %v196
      %v203 = vmax.f32 %v186, %v199
      %v204 = vsub.f32 %v183, %v200
      %v205 = vsub.f32 %v184, %v201
      %v206 = vsub.f32 %v185, %v202
      %v207 = vsub.f32 %v186, %v203
      %v208 = vmul.f32 %v204, 1.442695
      %v209 = vpow.pop %v208
      %v210 = vmul.f32 %v205, 1.442695
      %v211 = vpow.pop %v210
      %v212 = vmul.f32 %v206, 1.442695
      %v213 = vpow.pop %v212
      %v214 = vmul.f32 %v207, 1.442695
      %v215 = vpow.pop %v214
      %217 = vset.pattern.permute.xlu0 0
      %218 = vperm.xlu0 %217, %v200
      %v219 = vpop.permute.xlu0 %218
      %222 = vset.pattern.permute.xlu0 0
      %223 = vperm.xlu0 %222, %v201
      %v224 = vpop.permute.xlu0 %223
      %227 = vset.pattern.permute.xlu0 0
      %228 = vperm.xlu0 %227, %v202
      %v229 = vpop.permute.xlu0 %228
      %232 = vset.pattern.permute.xlu0 0
      %233 = vperm.xlu0 %232, %v203
      %v234 = vpop.permute.xlu0 %233
      %v236 = vsub.f32 %v164, %v219
      %v237 = vsub.f32 %v169, %v224
      %v238 = vsub.f32 %v174, %v229
      %v239 = vsub.f32 %v179, %v234
      %v240 = vmul.f32 %v236, 1.442695
      %v241 = vpow.pop %v240
      %v242 = vmul.f32 %v237, 1.442695
      %v243 = vpow.pop %v242
      %v244 = vmul.f32 %v238, 1.442695
      %v245 = vpow.pop %v244
      %v246 = vmul.f32 %v239, 1.442695
      %v247 = vpow.pop %v246
      %s248 = scalar_lea.vmem [#allocation3], %s58
      %v249 = vld [vmem:[%s248] sm:$0xff]
      %v250 = vld [vmem:[%s248 + $0x8] sm:$0xff]
      %v251 = vld [vmem:[%s248 + $0x10] sm:$0xff]
      %v252 = vld [vmem:[%s248 + $0x18] sm:$0xff]
      %v253 = vmul.f32 %v209, %v249
      %v254 = vmul.f32 %v211, %v250
      %v255 = vmul.f32 %v213, %v251
      %v256 = vmul.f32 %v215, %v252
      %v257 = vsel %vm187, %v241, 0.0
      %258 = vadd.xlane.f32.xlu0 %v257
      %v259 = vpop.xlane.xlu0 %258
      %v260 = vsel %vm187, %v243, 0.0
      %261 = vadd.xlane.f32.xlu0 %v260
      %v262 = vpop.xlane.xlu0 %261
      %v263 = vsel %vm187, %v245, 0.0
      %264 = vadd.xlane.f32.xlu0 %v263
      %v265 = vpop.xlane.xlu0 %264
      %v266 = vsel %vm187, %v247, 0.0
      %267 = vadd.xlane.f32.xlu0 %v266
      %v268 = vpop.xlane.xlu0 %267
      %v269 = vadd.f32 %v253, %v259
      %v270 = vadd.f32 %v254, %v262
      %v271 = vadd.f32 %v255, %v265
      %v272 = vadd.f32 %v256, %v268
      %vm273 = vcmask 7168
      %274 = vst.msk [vmem:[%s248] sm:$0xff] %vm273, %v269
      %275 = vst.msk [vmem:[%s248 + $0x8] sm:$0xff] %vm273, %v270
      %276 = vst.msk [vmem:[%s248 + $0x10] sm:$0xff] %vm273, %v271
      %277 = vst.msk [vmem:[%s248 + $0x18] sm:$0xff] %vm273, %v272
      %s278 = scalar_lea.vmem [#allocation4], %s58
      %v279 = vld [vmem:[%s278] sm:$0xff]
      %v280 = vld [vmem:[%s278 + $0x8] sm:$0xff]
      %v281 = vld [vmem:[%s278 + $0x10] sm:$0xff]
      %v282 = vld [vmem:[%s278 + $0x18] sm:$0xff]
      %v283 = vmul.f32 %v209, %v279
      %v284 = vmul.f32 %v211, %v280
      %v285 = vmul.f32 %v213, %v281
      %v286 = vmul.f32 %v215, %v282
      %v287 = vmul.f32 %v241, %v60
      %v288 = vmul.f32 %v243, %v61
      %v289 = vmul.f32 %v245, %v62
      %v290 = vmul.f32 %v247, %v63
      %v291 = vsel %vm187, %v287, 0.0
      %292 = vadd.xlane.f32.xlu0 %v291
      %v293 = vpop.xlane.xlu0 %292
      %v294 = vsel %vm187, %v288, 0.0
      %295 = vadd.xlane.f32.xlu0 %v294
      %v296 = vpop.xlane.xlu0 %295
      %v297 = vsel %vm187, %v289, 0.0
      %298 = vadd.xlane.f32.xlu0 %v297
      %v299 = vpop.xlane.xlu0 %298
      %v300 = vsel %vm187, %v290, 0.0
      %301 = vadd.xlane.f32.xlu0 %v300
      %v302 = vpop.xlane.xlu0 %301
      %v303 = vadd.f32 %v283, %v293
      %v304 = vadd.f32 %v284, %v296
      %v305 = vadd.f32 %v285, %v299
      %v306 = vadd.f32 %v286, %v302
      %307 = vst.msk [vmem:[%s278] sm:$0xff] %vm273, %v303
      %308 = vst.msk [vmem:[%s278 + $0x8] sm:$0xff] %vm273, %v304
      %309 = vst.msk [vmem:[%s278 + $0x10] sm:$0xff] %vm273, %v305
      %310 = vst.msk [vmem:[%s278 + $0x18] sm:$0xff] %vm273, %v306
      %311 = vst.msk [vmem:[%s182] sm:$0xff] %vm273, %v200
      %312 = vst.msk [vmem:[%s182 + $0x8] sm:$0xff] %vm273, %v201
      %313 = vst.msk [vmem:[%s182 + $0x10] sm:$0xff] %vm273, %v202
      %314 = vst.msk [vmem:[%s182 + $0x18] sm:$0xff] %vm273, %v203
    $region22: #{tpu_custom_call.1} parent=1 // loop_footer
      %s57 = sadd.s32 1, %s53
    $region23: #{tpu_custom_call.1} parent=1 // loop_footer_branch
      %52 = sbr.rel target = $region19
    $region24: #{tpu_custom_call.1} parent=1 // loop_exit
      _
    // Predicated region
    $region25: #{tpu_custom_call.1} parent=1 // pred_check
      %p315 = pneg %p15
    $region26: #{tpu_custom_call.1} parent=1 // pred_check_branch
      %317 = sbr.rel (%p315) target = $region28
    $region27: #{tpu_custom_call.1} parent=1 // pred_region
      %v318 = vld [vmem:[#allocation4] sm:$0xff]
      %v319 = vld [vmem:[#allocation4 + $0x8] sm:$0xff]
      %v320 = vld [vmem:[#allocation4 + $0x10] sm:$0xff]
      %v321 = vld [vmem:[#allocation4 + $0x18] sm:$0xff]
      %v322 = vld [vmem:[#allocation4 + $0x20] sm:$0xff]
      %v323 = vld [vmem:[#allocation4 + $0x28] sm:$0xff]
      %v324 = vld [vmem:[#allocation4 + $0x30] sm:$0xff]
      %v325 = vld [vmem:[#allocation4 + $0x38] sm:$0xff]
      %v326 = vld [vmem:[#allocation3] sm:$0xff]
      %v327 = vld [vmem:[#allocation3 + $0x8] sm:$0xff]
      %v328 = vld [vmem:[#allocation3 + $0x10] sm:$0xff]
      %v329 = vld [vmem:[#allocation3 + $0x18] sm:$0xff]
      %v330 = vld [vmem:[#allocation3 + $0x20] sm:$0xff]
      %v331 = vld [vmem:[#allocation3 + $0x28] sm:$0xff]
      %v332 = vld [vmem:[#allocation3 + $0x30] sm:$0xff]
      %v333 = vld [vmem:[#allocation3 + $0x38] sm:$0xff]
      %v334 = vrcp.pop %v326
      %v335 = vrcp.pop %v327
      %v336 = vrcp.pop %v328
      %v337 = vrcp.pop %v329
      %v338 = vrcp.pop %v330
      %v339 = vrcp.pop %v331
      %v340 = vrcp.pop %v332
      %v341 = vrcp.pop %v333
      %v342 = vmul.f32 %v318, %v334
      %v343 = vmul.f32 %v319, %v335
      %v344 = vmul.f32 %v320, %v336
      %v345 = vmul.f32 %v321, %v337
      %v346 = vmul.f32 %v322, %v338
      %v347 = vmul.f32 %v323, %v339
      %v348 = vmul.f32 %v324, %v340
      %v349 = vmul.f32 %v325, %v341
      %358 = vset.pattern.permute.xlu0 0
      %359 = vperm.xlu0 %358, %v342
      %v360 = vpop.permute.xlu0 %359
      %361 = vset.pattern.permute.xlu0 0
      %362 = vperm.xlu0 %361, %v343
      %v363 = vpop.permute.xlu0 %362
      %364 = vset.pattern.permute.xlu0 0
      %365 = vperm.xlu0 %364, %v344
      %v366 = vpop.permute.xlu0 %365
      %367 = vset.pattern.permute.xlu0 0
      %368 = vperm.xlu0 %367, %v345
      %v369 = vpop.permute.xlu0 %368
      %370 = vset.pattern.permute.xlu0 0
      %371 = vperm.xlu0 %370, %v346
      %v372 = vpop.permute.xlu0 %371
      %373 = vset.pattern.permute.xlu0 0
      %374 = vperm.xlu0 %373, %v347
      %v375 = vpop.permute.xlu0 %374
      %376 = vset.pattern.permute.xlu0 0
      %377 = vperm.xlu0 %376, %v348
      %v378 = vpop.permute.xlu0 %377
      %379 = vset.pattern.permute.xlu0 0
      %380 = vperm.xlu0 %379, %v349
      %v381 = vpop.permute.xlu0 %380
      %v382 = vlaneseq
      %v383 = vand.u32 %v382, 127
      %v384 = vlaneseq
      %v385 = vshrl.u32 %v384, 7
      %v386 = vsub.s32 %v383, %v385
      %v387 = vrot.slane %v360, %v386
      %v388 = vadd.s32 %v383, 4294967288
      %v389 = vlaneseq
      %v390 = vshrl.u32 %v389, 7
      %v391 = vsub.s32 %v388, %v390
      %v392 = vrot.slane %v363, %v391
      %vm393 = vcmask 130112
      %v394 = vsel %vm393, %v392, %v387
      %v395 = vadd.s32 %v383, 4294967280
      %v396 = vlaneseq
      %v397 = vshrl.u32 %v396, 7
      %v398 = vsub.s32 %v395, %v397
      %v399 = vrot.slane %v366, %v398
      %vm400 = vcmask 195712
      %v401 = vsel %vm400, %v399, %v394
      %v402 = vadd.s32 %v383, 4294967272
      %v403 = vlaneseq
      %v404 = vshrl.u32 %v403, 7
      %v405 = vsub.s32 %v402, %v404
      %v406 = vrot.slane %v369, %v405
      %vm407 = vcmask 261312
      %v408 = vsel %vm407, %v406, %v401
      %v409 = vlaneseq
      %v410 = vshrl.u32 %v409, 7
      %v411 = vsub.s32 %v383, %v410
      %v412 = vrot.slane %v372, %v411
      %v413 = vlaneseq
      %v414 = vshrl.u32 %v413, 7
      %v415 = vsub.s32 %v388, %v414
      %v416 = vrot.slane %v375, %v415
      %v417 = vsel %vm393, %v416, %v412
      %v418 = vlaneseq
      %v419 = vshrl.u32 %v418, 7
      %v420 = vsub.s32 %v395, %v419
      %v421 = vrot.slane %v378, %v420
      %v422 = vsel %vm400, %v421, %v417
      %v423 = vlaneseq
      %v424 = vshrl.u32 %v423, 7
      %v425 = vsub.s32 %v402, %v424
      %v426 = vrot.slane %v381, %v425
      %v427 = vsel %vm407, %v426, %v422
      %vm428 = vcmask 1041409
      %v429 = vsel %vm428, %v427, %v408
      %vm431 = vcmask 254976
      %432 = vst.msk [vmem:[#allocation5] sm:$0x3] %vm431, %v429
    $region28: #{tpu_custom_call.1} parent=1 // pred_fallthru
      _
    // Predicated region
    $region29: #{tpu_custom_call.1} parent=1 // pred_check
      _
    $region30: #{tpu_custom_call.1} parent=1 // pred_check_branch
      %434 = sbr.rel (0) target = $region32
    $region31: #{tpu_custom_call.1} parent=1 // pred_region
      %s436 = ssub.s32 32, 32
      %437 = vsyncadd [#allocation6], %s436
      %s439 = sshll.u32 [#allocation5], 4
      %s440 = int_to_ptr.vmem [resolvable:$true] %s439
      %442 = dma.vmem_to_hbm [thread:$0]  %s440, 32, %s3, [#allocation6]
    $region32: #{tpu_custom_call.1} parent=1 // pred_fallthru
      _
    // Predicated region
    $region33: #{tpu_custom_call.1} parent=1 // pred_check
      _
    $region34: #{tpu_custom_call.1} parent=1 // pred_check_branch
      %444 = sbr.rel (0) target = $region36
    $region35: #{tpu_custom_call.1} parent=1 // pred_region
      %445 = dma.done [#allocation6], 32
    $region36: #{tpu_custom_call.1} parent=1 // pred_fallthru
      _
    %446 = vsyncpa [#allocation6], 1

</llo_original>
